<compile_context>
chip_gen: v6e
topology: v6e:2x2x1
jax: 0.10.0
libtpu: 0.0.40
codegen_flags: <defaults>
</compile_context>

<pallas_src>
import jax
import jax.numpy as jnp
from jax.experimental import pallas as pl
from jax.experimental.pallas import tpu as pltpu


def _linear_add_relu_kernel_f32out(x_ref, w_ref, b_ref, other_ref, out_ref):
    """f32 output: accumulate straight into the (k-resident) output block."""
    k = pl.program_id(2)

    @pl.when(k == 0)
    def _():
        out_ref[...] = jnp.zeros_like(out_ref)

    out_ref[...] += jnp.dot(x_ref[...], w_ref[...],
                            preferred_element_type=jnp.float32)

    @pl.when(k == pl.num_programs(2) - 1)
    def _():
        res = (out_ref[...]
               + b_ref[...].astype(jnp.float32)
               + other_ref[...].astype(jnp.float32))
        out_ref[...] = jnp.maximum(res, 0.0)


def _linear_add_relu_kernel_scratch(x_ref, w_ref, b_ref, other_ref, out_ref, acc_ref):
    """Sub-f32 output: f32 VMEM accumulator scratch, cast in the epilogue."""
    k = pl.program_id(2)

    @pl.when(k == 0)
    def _():
        acc_ref[...] = jnp.zeros_like(acc_ref)

    acc_ref[...] += jnp.dot(x_ref[...], w_ref[...],
                            preferred_element_type=jnp.float32)

    @pl.when(k == pl.num_programs(2) - 1)
    def _():
        res = (acc_ref[...]
               + b_ref[...].astype(jnp.float32)
               + other_ref[...].astype(jnp.float32))
        out_ref[...] = jnp.maximum(res, 0.0).astype(out_ref.dtype)


def _largest_aligned_divisor(dim, cap, align):
    """Largest d <= cap with d % align == 0 and dim % d == 0 (None if none exists)."""
    best = None
    d = align
    top = min(dim, cap)
    while d <= top:
        if dim % d == 0:
            best = d
        d += align
    return best


def _pick_tile(dim, base, align):
    if dim <= base:
        return dim                      # full extent is always a legal block dim
    if dim % base == 0:
        return base
    d = _largest_aligned_divisor(dim, base, align)
    # TODO(synk): dims with no aligned divisor fall back to one full-extent block.
    return d if d is not None else dim


def _vmem_capacity_bytes():
    try:
        return int(pltpu.get_tpu_info().vmem_capacity_bytes)
    except Exception:
        return 64 * 1024 * 1024         # conservative (v7x per-TC VMEM)


def linear_add_relu(x, weight_t, bias, other, *, use_bf16_operands=True):
    """relu(x @ weight_t + bias + other).

    x:        [..., K]
    weight_t: [K, N]   (torch weight [N, K] transposed)
    bias:     [N]
    other:    broadcastable to x.shape[:-1] + (N,)
    """
    *lead, K = x.shape
    N = weight_t.shape[1]
    M = 1
    for d in lead:
        M *= d

    out_dtype = x.dtype
    use_bf16 = use_bf16_operands and jnp.dtype(x.dtype) == jnp.dtype(jnp.float32)
    op_dtype = jnp.bfloat16 if use_bf16 else x.dtype

    x2 = x.reshape(M, K).astype(op_dtype)
    w2 = weight_t.astype(op_dtype)

    # Lane-dense output: pad N up to a multiple of 128 (sliced off at the end).
    Np = ((N + 127) // 128) * 128
    if Np != N:
        w2 = jnp.pad(w2, ((0, 0), (0, Np - N)))
    bias2 = bias.reshape(1, N)
    if Np != N:
        bias2 = jnp.pad(bias2, ((0, 0), (0, Np - N)))

    # Generation-aware base tiles + VMEM budget.
    vmem_cap = _vmem_capacity_bytes()
    if vmem_cap >= 96 * 1024 * 1024:        # 128 MiB parts (v5e / v6e)
        base_m = base_n = 1024
        base_k = 2048 if use_bf16 else 1024
    else:                                   # 64 MiB parts (v7x, per TensorCore)
        base_m = base_n = base_k = 512

    tm = _pick_tile(M, base_m, 8)
    tn = _pick_tile(Np, base_n, 128)
    tk = _pick_tile(K, base_k, 128)

    # Megacore: if both parallel grid axes would have extent 1, split M so 2 TCs get work.
    if -(-M // tm) == 1 and -(-Np // tn) == 1 and M >= 16:
        half = _largest_aligned_divisor(M, M // 2, 8)
        if half is not None:
            tm = half

    # `other`: resolve broadcasts through the index_map instead of materializing in HBM.
    o_lead = tuple(other.shape[:-1])
    o_lead = (1,) * (len(lead) - len(o_lead)) + o_lead
    m_other = 1
    for d in o_lead:
        m_other *= d

    if all(d == 1 for d in o_lead):
        other2 = other.reshape(1, N)
        other_rows, other_map = 1, (lambda i, j, k: (0, j))
    elif tuple(o_lead) == tuple(lead):
        other2 = other.reshape(M, N)
        other_rows, other_map = M, (lambda i, j, k: (i, j))
    else:
        first_full = next((ix for ix, d in enumerate(o_lead) if d != 1), len(o_lead))
        prefix_bcast = all(o_lead[ix] == lead[ix] for ix in range(first_full, len(lead)))
        if prefix_bcast and m_other % tm == 0:
            nblk = m_other // tm
            other2 = other.reshape(m_other, N)
            other_rows, other_map = m_other, (lambda i, j, k: (i % nblk, j))
        else:
            # TODO(synk): non-prefix partial broadcasts still materialize an MxN copy.
            other2 = jnp.broadcast_to(other, tuple(lead) + (N,)).reshape(M, N)
            other_rows, other_map = M, (lambda i, j, k: (i, j))
    if Np != N:
        other2 = jnp.pad(other2, ((0, 0), (0, Np - N)))
    otm = tm if other_rows != 1 else 1

    grid = (pl.cdiv(M, tm), pl.cdiv(Np, tn), pl.cdiv(K, tk))

    op_isz = jnp.dtype(op_dtype).itemsize
    out_isz = jnp.dtype(out_dtype).itemsize
    oth_isz = jnp.dtype(other2.dtype).itemsize
    b_isz = jnp.dtype(bias2.dtype).itemsize

    use_scratch = jnp.dtype(out_dtype) != jnp.dtype(jnp.float32)

    vmem_bytes = (
        2 * (tm * tk + tk * tn) * op_isz          # double-buffered x / W tiles
        + 2 * tm * tn * out_isz                   # double-buffered output tile (the accumulator when f32)
        + (tm * tn * 4 if use_scratch else 0)     # f32 accumulator scratch (sub-f32 outputs only)
        + 2 * (otm * tn * oth_isz + tn * b_isz)   # k-invariant bias / other tiles
    )
    vmem_limit = int(min(max(vmem_bytes * 1.5, 32 * 1024 * 1024), 0.85 * vmem_cap))

    cost = pl.CostEstimate(
        flops=2 * M * Np * K,
        transcendentals=0,
        bytes_accessed=(op_isz * (M * K + K * Np)
                        + oth_isz * other_rows * Np + b_isz * Np
                        + out_isz * M * Np),
    )

    kernel = _linear_add_relu_kernel_scratch if use_scratch else _linear_add_relu_kernel_f32out
    scratch = [pltpu.VMEM((tm, tn), jnp.float32)] if use_scratch else []

    out2 = pl.pallas_call(
        kernel,
        out_shape=jax.ShapeDtypeStruct((M, Np), out_dtype),
        grid_spec=pltpu.PrefetchScalarGridSpec(
            num_scalar_prefetch=0,
            grid=grid,
            in_specs=[
                pl.BlockSpec((tm, tk), lambda i, j, k: (i, k)),   # x tile
                pl.BlockSpec((tk, tn), lambda i, j, k: (k, j)),   # W tile
                pl.BlockSpec((1, tn), lambda i, j, k: (0, j)),    # bias (k-invariant)
                pl.BlockSpec((otm, tn), other_map),               # other (k-invariant)
            ],
            out_specs=pl.BlockSpec((tm, tn), lambda i, j, k: (i, j)),
            scratch_shapes=scratch,
        ),
        compiler_params=pltpu.CompilerParams(
            dimension_semantics=("parallel", "parallel", "arbitrary"),
            vmem_limit_bytes=vmem_limit,
        ),
        cost_estimate=cost,
    )(x2, w2, bias2, other2)

    if Np != N:
        out2 = out2[:, :N]
    return out2.reshape(tuple(lead) + (N,))


if __name__ == "__main__":
    # Spec: x1 = torch.randn(1, 3, 64, 64); Linear acts on the last dim.
    # torch.nn.Linear() carries no sizes in the spec -> assume in_features = out_features = 64.
    B, C, H, K = 1, 3, 64, 64
    N = 64

    key = jax.random.PRNGKey(0)
    kx, kw, kb, ko = jax.random.split(key, 4)

    x = jax.random.normal(kx, (B, C, H, K), dtype=jnp.float32)
    weight = jax.random.normal(kw, (N, K), dtype=jnp.float32) * 0.1   # torch layout [N, K]
    bias = jax.random.normal(kb, (N,), dtype=jnp.float32) * 0.1
    other = jax.random.normal(ko, (B, C, H, N), dtype=jnp.float32)

    out = linear_add_relu(x, weight.T, bias, other, use_bf16_operands=True)
    out = jax.block_until_ready(out)

    # Reference: same bf16 operand rounding as the kernel, f32 math at highest precision.
    x_r = x.astype(jnp.bfloat16).astype(jnp.float32)
    w_r = weight.astype(jnp.bfloat16).astype(jnp.float32)
    ref = jnp.maximum(
        jnp.einsum("bchk,nk->bchn", x_r, w_r, precision=jax.lax.Precision.HIGHEST)
        + bias + other, 0.0)

    assert out.shape == ref.shape
    assert out.dtype == ref.dtype
    assert jnp.allclose(out, ref, atol=1e-3, rtol=1e-3)

    print("KERNEL_OK")
</pallas_src>

<mosaic_0001>
module attributes {stable_mosaic.version = 11 : i64} {
  func.func @_linear_add_relu_kernel_f32out(%arg0: i32, %arg1: i32, %arg2: i32, %arg3: memref<96x64xbf16, #tpu.memory_space<vmem>>, %arg4: memref<64x128xbf16, #tpu.memory_space<vmem>>, %arg5: memref<1x128xf32, #tpu.memory_space<vmem>>, %arg6: memref<96x128xf32, #tpu.memory_space<vmem>>, %arg7: memref<96x128xf32, #tpu.memory_space<vmem>>) attributes {dimension_semantics = [#tpu.dimension_semantics<parallel>, #tpu.dimension_semantics<parallel>, #tpu.dimension_semantics<arbitrary>], iteration_bounds = array<i64: 2, 1, 1>, scalar_prefetch = 0 : i64, scratch_operands = 0 : i64, tpu.core_type = #tpu.core_type<tc>, window_params = [{transform_indices = @transform_0, window_bounds = array<i64: 96, 64>}, {transform_indices = @transform_1, window_bounds = array<i64: 64, 128>}, {transform_indices = @transform_2, window_bounds = array<i64: 1, 128>}, {transform_indices = @transform_3, window_bounds = array<i64: 96, 128>}, {transform_indices = @transform_4, window_bounds = array<i64: 96, 128>}]} {
    %c0_i32 = arith.constant 0 : i32
    %0 = arith.cmpi eq, %arg2, %c0_i32 : i32
    %1 = arith.extui %0 : i1 to i32
    %c0_i32_0 = arith.constant 0 : i32
    %2 = arith.cmpi ne, %1, %c0_i32_0 : i32
    scf.if %2 {
      %cst_10 = arith.constant 0.000000e+00 : f32
      %12 = vector.broadcast %cst_10 : f32 to vector<96x128xf32>
      %c0_11 = arith.constant 0 : index
      %c0_12 = arith.constant 0 : index
      %13 = vector.load %arg7[%c0_11, %c0_12] : memref<96x128xf32, #tpu.memory_space<vmem>>, vector<96x128xf32>
      tpu.vector_store %arg7[%c0_11, %c0_12], %12 {strides = array<i32>} : memref<96x128xf32, #tpu.memory_space<vmem>>, vector<96x128xf32>,
    } else {
    }
    %c0 = arith.constant 0 : index
    %c0_1 = arith.constant 0 : index
    %3 = vector.load %arg7[%c0, %c0_1] : memref<96x128xf32, #tpu.memory_space<vmem>>, vector<96x128xf32>
    %c0_2 = arith.constant 0 : index
    %c0_3 = arith.constant 0 : index
    %4 = vector.load %arg3[%c0_2, %c0_3] : memref<96x64xbf16, #tpu.memory_space<vmem>>, vector<96x64xbf16>
    %c0_4 = arith.constant 0 : index
    %c0_5 = arith.constant 0 : index
    %5 = vector.load %arg4[%c0_4, %c0_5] : memref<64x128xbf16, #tpu.memory_space<vmem>>, vector<64x128xbf16>
    %cst = arith.constant dense<0.000000e+00> : vector<96x128xf32>
    %6 = tpu.matmul %4, %5, %cst {dimension_numbers = #tpu.dot_dimension_numbers<[1], [0], [0], [1], [0, 0, 1, 1], [], []>} : vector<96x64xbf16>, vector<64x128xbf16>, vector<96x128xf32> -> vector<96x128xf32>
    %7 = arith.addf %3, %6 : vector<96x128xf32>
    %c0_6 = arith.constant 0 : index
    %c0_7 = arith.constant 0 : index
    %8 = vector.load %arg7[%c0_6, %c0_7] : memref<96x128xf32, #tpu.memory_space<vmem>>, vector<96x128xf32>
    tpu.vector_store %arg7[%c0_6, %c0_7], %7 {strides = array<i32>} : memref<96x128xf32, #tpu.memory_space<vmem>>, vector<96x128xf32>,
    %c0_i32_8 = arith.constant 0 : i32
    %9 = arith.cmpi eq, %arg2, %c0_i32_8 : i32
    %10 = arith.extui %9 : i1 to i32
    %c0_i32_9 = arith.constant 0 : i32
    %11 = arith.cmpi ne, %10, %c0_i32_9 : i32
    scf.if %11 {
      %c0_10 = arith.constant 0 : index
      %c0_11 = arith.constant 0 : index
      %12 = vector.load %arg7[%c0_10, %c0_11] : memref<96x128xf32, #tpu.memory_space<vmem>>, vector<96x128xf32>
      %c0_12 = arith.constant 0 : index
      %c0_13 = arith.constant 0 : index
      %13 = vector.load %arg5[%c0_12, %c0_13] : memref<1x128xf32, #tpu.memory_space<vmem>>, vector<1x128xf32>
      %14 = vector.broadcast %13 : vector<1x128xf32> to vector<96x128xf32>
      %15 = arith.addf %12, %14 : vector<96x128xf32>
      %c0_14 = arith.constant 0 : index
      %c0_15 = arith.constant 0 : index
      %16 = vector.load %arg6[%c0_14, %c0_15] : memref<96x128xf32, #tpu.memory_space<vmem>>, vector<96x128xf32>
      %17 = arith.addf %15, %16 : vector<96x128xf32>
      %cst_16 = arith.constant 0.000000e+00 : f32
      %18 = vector.broadcast %cst_16 : f32 to vector<96x128xf32>
      %19 = arith.maximumf %17, %18 : vector<96x128xf32>
      %c0_17 = arith.constant 0 : index
      %c0_18 = arith.constant 0 : index
      %20 = vector.load %arg7[%c0_17, %c0_18] : memref<96x128xf32, #tpu.memory_space<vmem>>, vector<96x128xf32>
      tpu.vector_store %arg7[%c0_17, %c0_18], %19 {strides = array<i32>} : memref<96x128xf32, #tpu.memory_space<vmem>>, vector<96x128xf32>,
    } else {
    }
    return
  }
  func.func @transform_0(%arg0: i32, %arg1: i32, %arg2: i32) -> (i32, i32) {
    %c0_i32 = arith.constant 0 : i32
    return %arg0, %arg2 : i32, i32
  }
  func.func @transform_1(%arg0: i32, %arg1: i32, %arg2: i32) -> (i32, i32) {
    %c0_i32 = arith.constant 0 : i32
    return %arg2, %arg1 : i32, i32
  }
  func.func @transform_2(%arg0: i32, %arg1: i32, %arg2: i32) -> (i32, i32) {
    %c0_i32 = arith.constant 0 : i32
    %c0_i32_0 = arith.constant 0 : i32
    return %c0_i32, %arg1 : i32, i32
  }
  func.func @transform_3(%arg0: i32, %arg1: i32, %arg2: i32) -> (i32, i32) {
    %c0_i32 = arith.constant 0 : i32
    return %arg0, %arg1 : i32, i32
  }
  func.func @transform_4(%arg0: i32, %arg1: i32, %arg2: i32) -> (i32, i32) {
    %c0_i32 = arith.constant 0 : i32
    return %arg0, %arg1 : i32, i32
  }
}

</mosaic_0001>

<llo_original>
// kernel: tpu_custom_call.1
$region0: #{tpu_custom_call.1}
  #allocation0 [shape = 'u32[]', space=smem, size = 0x4, offset = 0x4, fixed_abs, tag = 'smem constant byte address 0x4 - core index']
  #allocation1 [shape = 'u32[144,128]{1,0:T(1,128)}', space=vmem, size = 0x12000, scoped, tag = 'internal scratch']
  %s0 = inlined_call_operand.vmem [shape: bf16[192,64], index: 0, kind: input, shape index: {}]
  %s1 = inlined_call_operand.vmem [shape: bf16[64,128], index: 1, kind: input, shape index: {}]
  %s2 = inlined_call_operand.vmem [shape: f32[1,128], index: 2, kind: input, shape index: {}]
  %s3 = inlined_call_operand.hbm [shape: f32[192,128], index: 3, kind: input, shape index: {}]
  %s4 = inlined_call_operand.hbm [shape: f32[192,128], index: 4, kind: output, shape index: {}]
  %s5 = sld [smem:[#allocation0]]
  $region61: #{tpu_custom_call.1} parent=0
    _
  %s7 = ssub.s32 1, %s5
  %s8 = scalar_select 0, %s7, %s5
  $region1: #{tpu_custom_call.1} parent=0
    #allocation2 [shape = 'u8[98304]{0}', space=vmem, size = 0x18000, scoped, tag = 'input window, operand 3']
    #allocation3 [shape = 's32[2]{0}', space=sflag, size = 0x8, scoped, tag = 'scoped memory for tpu_custom_call.1']
    #allocation4 [shape = 's32[2]{0}', space=sflag, size = 0x8, scoped, tag = 'scoped memory for tpu_custom_call.1']
    #allocation5 [shape = 'u8[98304]{0}', space=vmem, size = 0x18000, scoped, tag = 'output window, operand 0']
    %9 = vsyncpa [#allocation3], 0
    %s10 = scalar_lea.sflag [#allocation3], 1
    %11 = vsyncpa %s10, 0
    %12 = vsyncpa [#allocation4], 0
    %s13 = scalar_lea.sflag [#allocation4], 1
    %14 = vsyncpa %s13, 0
    loop: start=0, step=1, limit=4
    $region2: #{tpu_custom_call.1} parent=1 // loop_pre_header
      _
    $region3: #{tpu_custom_call.1} parent=1 // loop_header
      %s16 = sphi 0, %s20
      %p17 = scmp.ge.s32.totalorder %s16, 4
      %s23 = sphi 0, %s42
      %s24 = sphi 0, %s38
      %s25 = sphi 0, %s34
      %s26 = sphi 0, %s23
      %s27 = sphi 0, %s24
      %s28 = sphi 0, %s25
      %s29 = sphi 0, %s26
      %s30 = sphi 0, %s27
      %s31 = sphi 0, %s28
      %s47 = sphi 0, %s49
      %s50 = sphi 0, %s47
      %s51 = sphi 0, %s50
      %s67 = sphi 0, %s51
      %s75 = sphi 0, %s77
      %s78 = sphi 0, %s75
      %s79 = sphi 0, %s78
      %s95 = sphi 0, %s79
      %s101 = sphi 0, %s103
      %s104 = sphi 0, %s101
      %s105 = sphi 0, %s104
      %s121 = sphi 0, %s105
      %s129 = sphi 0, %s131
      %s132 = sphi 0, %s129
      %s133 = sphi 0, %s132
      %s149 = sphi 0, %s133
      %s157 = sphi 0, %s159
      %s160 = sphi 0, %s157
      %s161 = sphi 0, %s160
      %s177 = sphi 0, %s161
    $region4: #{tpu_custom_call.1} parent=1 // loop_header_branch
      %19 = sbr.rel (%p17) target = $region8
    $region5: #{tpu_custom_call.1} parent=1 // loop_body
      %s21 = ssub.s32 %s16, 1
      %s22 = ssub.s32 %s16, 2
      %s32 = sadd.s32 1, %s25
      %p33 = scmp.ge.s32.totalorder %s32, 1
      %s34 = scalar_select %p33, 0, %s32
      %s35 = sadd.s32 1, %s24
      %s36 = scalar_select %p33, %s35, %s24
      %p37 = scmp.ge.s32.totalorder %s36, 1
      %s38 = scalar_select %p37, 0, %s36
      %s39 = sadd.s32 1, %s23
      %s40 = scalar_select %p37, %s39, %s23
      %p41 = scmp.ge.s32.totalorder %s40, 2
      %s42 = scalar_select %p41, 0, %s40
      %s43 = ssub.s32 %s23, %s42
      %s44 = ssub.s32 %s25, %s34
      %s45 = sor.u32 %s43, %s44
      %p46 = scmp.eq.s32.totalorder %s45, 0
      %s48 = sadd.s32 %s47, 1
      %s49 = scalar_select %p46, %s47, %s48
      %p52 = pneg %p46
      %p53 = scmp.eq.s32.totalorder %s16, 1
      %p54 = por %p52, %p53
      %p55 = scmp.ne.s32.totalorder %s47, %s50
      %p56 = scmp.eq.s32.totalorder %s16, 0
      %p57 = por %p55, %p56
      %p58 = scmp.ne.s32.totalorder %s47, %s50
      %p59 = scmp.eq.s32.totalorder %s21, 1
      %p60 = por %p58, %p59
      %p61 = scmp.ne.s32.totalorder %s50, %s51
      %p62 = scmp.eq.s32.totalorder %s21, 0
      %p63 = por %p61, %p62
      %p64 = scmp.ne.s32.totalorder %s50, %s51
      %p65 = scmp.eq.s32.totalorder %s22, 1
      %p66 = por %p64, %p65
      %p68 = scmp.ne.s32.totalorder %s51, %s67
      %p69 = scmp.eq.s32.totalorder %s22, 0
      %p70 = por %p68, %p69
      %s71 = ssub.s32 %s25, %s34
      %s72 = ssub.s32 %s24, %s38
      %s73 = sor.u32 %s71, %s72
      %p74 = scmp.eq.s32.totalorder %s73, 0
      %s76 = sadd.s32 %s75, 1
      %s77 = scalar_select %p74, %s75, %s76
      %p80 = pneg %p74
      %p81 = scmp.eq.s32.totalorder %s16, 1
      %p82 = por %p80, %p81
      %p83 = scmp.ne.s32.totalorder %s75, %s78
      %p84 = scmp.eq.s32.totalorder %s16, 0
      %p85 = por %p83, %p84
      %p86 = scmp.ne.s32.totalorder %s75, %s78
      %p87 = scmp.eq.s32.totalorder %s21, 1
      %p88 = por %p86, %p87
      %p89 = scmp.ne.s32.totalorder %s78, %s79
      %p90 = scmp.eq.s32.totalorder %s21, 0
      %p91 = por %p89, %p90
      %p92 = scmp.ne.s32.totalorder %s78, %s79
      %p93 = scmp.eq.s32.totalorder %s22, 1
      %p94 = por %p92, %p93
      %p96 = scmp.ne.s32.totalorder %s79, %s95
      %p97 = scmp.eq.s32.totalorder %s22, 0
      %p98 = por %p96, %p97
      %s99 = ssub.s32 %s24, %s38
      %p100 = scmp.eq.s32.totalorder %s99, 0
      %s102 = sadd.s32 %s101, 1
      %s103 = scalar_select %p100, %s101, %s102
      %p106 = pneg %p100
      %p107 = scmp.eq.s32.totalorder %s16, 1
      %p108 = por %p106, %p107
      %p109 = scmp.ne.s32.totalorder %s101, %s104
      %p110 = scmp.eq.s32.totalorder %s16, 0
      %p111 = por %p109, %p110
      %p112 = scmp.ne.s32.totalorder %s101, %s104
      %p113 = scmp.eq.s32.totalorder %s21, 1
      %p114 = por %p112, %p113
      %p115 = scmp.ne.s32.totalorder %s104, %s105
      %p116 = scmp.eq.s32.totalorder %s21, 0
      %p117 = por %p115, %p116
      %p118 = scmp.ne.s32.totalorder %s104, %s105
      %p119 = scmp.eq.s32.totalorder %s22, 1
      %p120 = por %p118, %p119
      %p122 = scmp.ne.s32.totalorder %s105, %s121
      %p123 = scmp.eq.s32.totalorder %s22, 0
      %p124 = por %p122, %p123
      %s125 = ssub.s32 %s23, %s42
      %s126 = ssub.s32 %s24, %s38
      %s127 = sor.u32 %s125, %s126
      %p128 = scmp.eq.s32.totalorder %s127, 0
      %s130 = sadd.s32 %s129, 1
      %s131 = scalar_select %p128, %s129, %s130
      %p134 = pneg %p128
      %p135 = scmp.eq.s32.totalorder %s16, 1
      %p136 = por %p134, %p135
      %p137 = scmp.ne.s32.totalorder %s129, %s132
      %p138 = scmp.eq.s32.totalorder %s16, 0
      %p139 = por %p137, %p138
      %p140 = scmp.ne.s32.totalorder %s129, %s132
      %p141 = scmp.eq.s32.totalorder %s21, 1
      %p142 = por %p140, %p141
      %p143 = scmp.ne.s32.totalorder %s132, %s133
      %p144 = scmp.eq.s32.totalorder %s21, 0
      %p145 = por %p143, %p144
      %p146 = scmp.ne.s32.totalorder %s132, %s133
      %p147 = scmp.eq.s32.totalorder %s22, 1
      %p148 = por %p146, %p147
      %p150 = scmp.ne.s32.totalorder %s133, %s149
      %p151 = scmp.eq.s32.totalorder %s22, 0
      %p152 = por %p150, %p151
      %s153 = ssub.s32 %s23, %s42
      %s154 = ssub.s32 %s24, %s38
      %s155 = sor.u32 %s153, %s154
      %p156 = scmp.eq.s32.totalorder %s155, 0
      %s158 = sadd.s32 %s157, 1
      %s159 = scalar_select %p156, %s157, %s158
      %p162 = pneg %p156
      %p163 = scmp.eq.s32.totalorder %s16, 1
      %p164 = por %p162, %p163
      %p165 = scmp.ne.s32.totalorder %s157, %s160
      %p166 = scmp.eq.s32.totalorder %s16, 0
      %p167 = por %p165, %p166
      %p168 = scmp.ne.s32.totalorder %s157, %s160
      %p169 = scmp.eq.s32.totalorder %s21, 1
      %p170 = por %p168, %p169
      %p171 = scmp.ne.s32.totalorder %s160, %s161
      %p172 = scmp.eq.s32.totalorder %s21, 0
      %p173 = por %p171, %p172
      %p174 = scmp.ne.s32.totalorder %s160, %s161
      %p175 = scmp.eq.s32.totalorder %s22, 1
      %p176 = por %p174, %p175
      %p178 = scmp.ne.s32.totalorder %s161, %s177
      %p179 = scmp.eq.s32.totalorder %s22, 0
      %p180 = por %p178, %p179
      %p181 = scmp.le.s32.totalorder 1, %s16
      %p182 = scmp.lt.s32.totalorder %s16, 3
      %p183 = pnand %p181, %p182
      %p184 = pneg %p183
      // Predicated region
      $region9: #{tpu_custom_call.1} parent=5 // pred_check
        _
      $region10: #{tpu_custom_call.1} parent=5 // pred_check_branch
        %186 = sbr.rel (%p183) target = $region12
      $region11: #{tpu_custom_call.1} parent=5 // pred_region
        %s187 = ssub.s32 %s16, 1
        // Predicated region
        $region13: #{tpu_custom_call.1} parent=11 // pred_check
          %p188 = pneg %p91
        $region14: #{tpu_custom_call.1} parent=11 // pred_check_branch
          %190 = sbr.rel (%p188) target = $region16
        $region15: #{tpu_custom_call.1} parent=11 // pred_region
          %s191 = smul.u32 8, %s28
          %p192 = scmp.lt.s32.totalorder %s191, 7
          %s193 = scalar_select %p192, %s191, 7
          %p194 = scmp.lt.s32.totalorder %s27, 0
          %s195 = scalar_select %p194, %s27, 0
          %s196 = sadd.s32 %s195, %s193
          %s197 = smul.addr %s196, 4
          %s198 = scalar_lea.vmem %s1, %s197
          %s199 = smul.u32 8, %s28
        $region16: #{tpu_custom_call.1} parent=11 // pred_fallthru
          _
        // Predicated region
        $region17: #{tpu_custom_call.1} parent=11 // pred_check
          %p200 = pneg %p117
        $region18: #{tpu_custom_call.1} parent=11 // pred_check_branch
          %202 = sbr.rel (%p200) target = $region20
        $region19: #{tpu_custom_call.1} parent=11 // pred_region
          %p203 = scmp.lt.s32.totalorder %s27, 0
          %s204 = scalar_select %p203, %s27, 0
          %s205 = scalar_lea.vmem %s2, %s204
        $region20: #{tpu_custom_call.1} parent=11 // pred_fallthru
          _
      $region12: #{tpu_custom_call.1} parent=5 // pred_fallthru
        _
      %p206 = scmp.lt.s32.totalorder %s16, 2
      // Predicated region
      $region21: #{tpu_custom_call.1} parent=5 // pred_check
        %p207 = pneg %p206
      $region22: #{tpu_custom_call.1} parent=5 // pred_check_branch
        %209 = sbr.rel (%p207) target = $region24
      $region23: #{tpu_custom_call.1} parent=5 // pred_region
        // Predicated region
        $region25: #{tpu_custom_call.1} parent=23 // pred_check
          %p210 = pneg %p57
        $region26: #{tpu_custom_call.1} parent=23 // pred_check_branch
          %212 = sbr.rel (%p210) target = $region28
        $region27: #{tpu_custom_call.1} parent=23 // pred_region
          %s213 = smul.u32 12, %s23
          %p214 = scmp.lt.s32.totalorder %s213, 23
          %s215 = scalar_select %p214, %s213, 23
          %p216 = scmp.lt.s32.totalorder %s25, 0
          %s217 = scalar_select %p216, %s25, 0
          %s218 = sadd.s32 %s217, %s215
          %s219 = smul.addr %s218, 4
          %s220 = scalar_lea.vmem %s0, %s219
          %s221 = smul.u32 12, %s23
        $region28: #{tpu_custom_call.1} parent=23 // pred_fallthru
          _
        // Predicated region
        $region29: #{tpu_custom_call.1} parent=23 // pred_check
          %p222 = pneg %p139
        $region30: #{tpu_custom_call.1} parent=23 // pred_check_branch
          %224 = sbr.rel (%p222) target = $region32
        $region31: #{tpu_custom_call.1} parent=23 // pred_region
          %s225 = sand.u32 %s129, 1
          %s226 = scalar_lea.sflag [#allocation3], %s225
          %s227 = sand.u32 %s129, 1
          %s228 = smul.addr %s227, 96
          %s229 = scalar_lea.vmem [#allocation2], %s228
          %s230 = smul.u32 12, %s23
          %s232 = ssub.s32 1536, 1536
          %233 = vsyncadd %s226, %s232
          %s234 = sadd.s32 %s24, %s230
          %s235 = smul.addr %s234, 128
          %s236 = scalar_lea.hbm %s3, %s235
          %s237 = sshll.u32 %s229, 4
          %s238 = int_to_ptr.vmem [resolvable:$true] %s237
          %243 = dma.hbm_to_vmem [thread:$0]  %s236, 1536, %s238, %s226, 128, 128, 8
        $region32: #{tpu_custom_call.1} parent=23 // pred_fallthru
          _
      $region24: #{tpu_custom_call.1} parent=5 // pred_fallthru
        _
      %p244 = scmp.le.s32.totalorder 1, %s16
      %p245 = scmp.lt.s32.totalorder %s16, 3
      %p246 = pnand %p244, %p245
      %p247 = pneg %p246
      // Predicated region
      $region33: #{tpu_custom_call.1} parent=5 // pred_check
        _
      $region34: #{tpu_custom_call.1} parent=5 // pred_check_branch
        %249 = sbr.rel (%p246) target = $region36
      $region35: #{tpu_custom_call.1} parent=5 // pred_region
        %s250 = ssub.s32 %s16, 1
        %s251 = sand.u32 %s132, 1
        %s252 = scalar_lea.sflag [#allocation3], %s251
        %s253 = sand.u32 %s132, 1
        %s254 = smul.addr %s253, 96
        %s255 = scalar_lea.vmem [#allocation2], %s254
        // Predicated region
        $region37: #{tpu_custom_call.1} parent=35 // pred_check
          %p256 = pneg %p145
        $region38: #{tpu_custom_call.1} parent=35 // pred_check_branch
          %258 = sbr.rel (%p256) target = $region40
        $region39: #{tpu_custom_call.1} parent=35 // pred_region
          %259 = dma.done %s252, 1536
        $region40: #{tpu_custom_call.1} parent=35 // pred_fallthru
          _
        %s260 = smul.u32 12, %s26
        %p261 = scmp.lt.s32.totalorder %s260, 23
        %s262 = scalar_select %p261, %s260, 23
        %p263 = scmp.lt.s32.totalorder %s28, 0
        %s264 = scalar_select %p263, %s28, 0
        %s265 = sadd.s32 %s264, %s262
        %s266 = smul.addr %s265, 4
        %s267 = scalar_lea.vmem %s0, %s266
        %p268 = pneg %p63
        %p269 = pneg %p60
        %s270 = smul.u32 8, %s28
        %p271 = scmp.lt.s32.totalorder %s270, 7
        %s272 = scalar_select %p271, %s270, 7
        %p273 = scmp.lt.s32.totalorder %s27, 0
        %s274 = scalar_select %p273, %s27, 0
        %s275 = sadd.s32 %s274, %s272
        %s276 = smul.addr %s275, 4
        %s277 = scalar_lea.vmem %s1, %s276
        %p278 = pneg %p91
        %p279 = pneg %p88
        %p280 = scmp.lt.s32.totalorder %s27, 0
        %s281 = scalar_select %p280, %s27, 0
        %s282 = scalar_lea.vmem %s2, %s281
        %p283 = pneg %p117
        %p284 = pneg %p114
        %s285 = sand.u32 %s132, 1
        %s286 = scalar_lea.sflag [#allocation3], %s285
        %s287 = sand.u32 %s132, 1
        %s288 = smul.addr %s287, 96
        %s289 = scalar_lea.vmem [#allocation2], %s288
        %p290 = pneg %p145
        %p291 = pneg %p142
        %p292 = pneg %p173
        %p293 = pneg %p170
        %s294 = sand.u32 %s160, 1
        %s295 = scalar_lea.sflag [#allocation4], %s294
        %s296 = sand.u32 %s160, 1
        %s297 = smul.addr %s296, 96
        %s298 = scalar_lea.vmem [#allocation5], %s297
        %s299 = smul.u32 12, %s26
        %p300 = scmp.lt.s32.totalorder %s299, 23
        %s301 = scalar_select %p300, %s299, 23
        %p302 = scmp.lt.s32.totalorder %s28, 0
        %s303 = scalar_select %p302, %s28, 0
        %s304 = sadd.s32 %s303, %s301
        %s305 = smul.addr %s304, 4
        %s306 = scalar_lea.vmem %s0, %s305
        %s307 = smul.u32 12, %s26
        %s308 = smul.u32 8, %s28
        %p309 = scmp.lt.s32.totalorder %s308, 7
        %s310 = scalar_select %p309, %s308, 7
        %p311 = scmp.lt.s32.totalorder %s27, 0
        %s312 = scalar_select %p311, %s27, 0
        %s313 = sadd.s32 %s312, %s310
        %s314 = smul.addr %s313, 4
        %s315 = scalar_lea.vmem %s1, %s314
        %s316 = smul.u32 8, %s28
        %p317 = scmp.lt.s32.totalorder %s27, 0
        %s318 = scalar_select %p317, %s27, 0
        %s319 = scalar_lea.vmem %s2, %s318
        %s320 = smul.u32 12, %s26
        %s321 = smul.u32 12, %s26
        %p323 = scmp.eq.s32.totalorder %s28, 0
        // Predicated region
        $region41: #{tpu_custom_call.1} parent=35 // pred_check
          %p324 = pneg %p323
        $region42: #{tpu_custom_call.1} parent=35 // pred_check_branch
          %326 = sbr.rel (%p324) target = $region44
        $region43: #{tpu_custom_call.1} parent=35 // pred_region
          %327 = vst [vmem:[%s298] sm:$0xff] 0.0
          %328 = vst [vmem:[%s298 + $0x8] sm:$0xff] 0.0
          %329 = vst [vmem:[%s298 + $0x10] sm:$0xff] 0.0
          %330 = vst [vmem:[%s298 + $0x18] sm:$0xff] 0.0
          %331 = vst [vmem:[%s298 + $0x20] sm:$0xff] 0.0
          %332 = vst [vmem:[%s298 + $0x28] sm:$0xff] 0.0
          %333 = vst [vmem:[%s298 + $0x30] sm:$0xff] 0.0
          %334 = vst [vmem:[%s298 + $0x38] sm:$0xff] 0.0
          %335 = vst [vmem:[%s298 + $0x40] sm:$0xff] 0.0
          %336 = vst [vmem:[%s298 + $0x48] sm:$0xff] 0.0
          %337 = vst [vmem:[%s298 + $0x50] sm:$0xff] 0.0
          %338 = vst [vmem:[%s298 + $0x58] sm:$0xff] 0.0
        $region44: #{tpu_custom_call.1} parent=35 // pred_fallthru
          _
        %v339 = vld [vmem:[%s298] sm:$0xff]
        %v340 = vld [vmem:[%s298 + $0x8] sm:$0xff]
        %v341 = vld [vmem:[%s298 + $0x10] sm:$0xff]
        %v342 = vld [vmem:[%s298 + $0x18] sm:$0xff]
        %v343 = vld [vmem:[%s298 + $0x20] sm:$0xff]
        %v344 = vld [vmem:[%s298 + $0x28] sm:$0xff]
        %v345 = vld [vmem:[%s298 + $0x30] sm:$0xff]
        %v346 = vld [vmem:[%s298 + $0x38] sm:$0xff]
        %v347 = vld [vmem:[%s298 + $0x40] sm:$0xff]
        %v348 = vld [vmem:[%s298 + $0x48] sm:$0xff]
        %v349 = vld [vmem:[%s298 + $0x50] sm:$0xff]
        %v350 = vld [vmem:[%s298 + $0x58] sm:$0xff]
        %v351 = vld [vmem:[%s306] sm:$0xf]
        %v352 = vld [vmem:[%s306 + $0x4] sm:$0xf]
        %v353 = vld [vmem:[%s306 + $0x8] sm:$0xf]
        %v354 = vld [vmem:[%s306 + $0xc] sm:$0xf]
        %v355 = vld [vmem:[%s306 + $0x10] sm:$0xf]
        %v356 = vld [vmem:[%s306 + $0x14] sm:$0xf]
        %v357 = vld [vmem:[%s306 + $0x18] sm:$0xf]
        %v358 = vld [vmem:[%s306 + $0x1c] sm:$0xf]
        %v359 = vld [vmem:[%s306 + $0x20] sm:$0xf]
        %v360 = vld [vmem:[%s306 + $0x24] sm:$0xf]
        %v361 = vld [vmem:[%s306 + $0x28] sm:$0xf]
        %v362 = vld [vmem:[%s306 + $0x2c] sm:$0xf]
        %v363 = vld [vmem:[%s315] sm:$0xf]
        %v364 = vld [vmem:[%s315 + $0x4] sm:$0xf]
        %v365 = vld [vmem:[%s315 + $0x8] sm:$0xf]
        %v366 = vld [vmem:[%s315 + $0xc] sm:$0xf]
        %v367 = vld [vmem:[%s315 + $0x10] sm:$0xf]
        %v368 = vld [vmem:[%s315 + $0x14] sm:$0xf]
        %v369 = vld [vmem:[%s315 + $0x18] sm:$0xf]
        %v370 = vld [vmem:[%s315 + $0x1c] sm:$0xf]
        %v383 = vunpack.c.l.b16 %v351
        %v384 = vunpack.c.l.b16 %v352
        %v385 = vunpack.c.l.b16 %v353
        %v386 = vunpack.c.l.b16 %v354
        %v387 = vunpack.c.l.b16 %v355
        %v388 = vunpack.c.l.b16 %v356
        %v389 = vunpack.c.l.b16 %v357
        %v390 = vunpack.c.l.b16 %v358
        %v391 = vunpack.c.l.b16 %v359
        %v392 = vunpack.c.l.b16 %v360
        %v393 = vunpack.c.l.b16 %v361
        %v394 = vunpack.c.l.b16 %v362
        %v395 = vpack.c.b16 %v384, %v383
        %v396 = vpack.c.b16 %v386, %v385
        %v397 = vpack.c.b16 %v388, %v387
        %v398 = vpack.c.b16 %v390, %v389
        %v399 = vpack.c.b16 %v392, %v391
        %v400 = vpack.c.b16 %v394, %v393
        %v409 = vunpack.c.l.b16 %v363
        %v410 = vunpack.c.l.b16 %v364
        %v411 = vunpack.c.l.b16 %v365
        %v412 = vunpack.c.l.b16 %v366
        %v413 = vunpack.c.l.b16 %v367
        %v414 = vunpack.c.l.b16 %v368
        %v415 = vunpack.c.l.b16 %v369
        %v416 = vunpack.c.l.b16 %v370
        %v417 = vpack.c.b16 %v410, %v409
        %v418 = vpack.c.b16 %v412, %v411
        %v419 = vpack.c.b16 %v414, %v413
        %v420 = vpack.c.b16 %v416, %v415
        %vm425 = vcmask 523264
        %v427 = vsel %vm425, %v395, 0
        %v430 = vsel %vm425, %v396, 0
        %v433 = vsel %vm425, %v397, 0
        %v436 = vsel %vm425, %v398, 0
        %v439 = vsel %vm425, %v399, 0
        %v442 = vsel %vm425, %v400, 0
        %444 = vmatprep.subr.bf16.mxu0 0
        %445 = vmatpush1.bf16.msra.mxu0 0
        %446 = vmatprep.subr.bf16.mxu0 0
        %447 = vmatpush1.bf16.msra.mxu0 0
        %448 = vmatprep.subr.bf16.mxu0 0
        %449 = vmatpush1.bf16.msra.mxu0 0
        %450 = vmatprep.subr.bf16.mxu0 0
        %451 = vmatpush1.bf16.msra.mxu0 0
        %452 = vmatprep.subr.bf16.mxu0 0
        %453 = vmatpush1.bf16.msra.mxu0 %v420
        %454 = vmatprep.subr.bf16.mxu0 0
        %455 = vmatpush1.bf16.msra.mxu0 %v419
        %456 = vmatprep.subr.bf16.mxu0 0
        %457 = vmatpush1.bf16.msra.mxu0 %v418
        %458 = vmatprep.subr.bf16.mxu0 0
        %459 = vmatpush1.bf16.msra.mxu0 %v417
        %460 = vmatprep.subr.bf16.mxu0 0
        %461 = vmatpush2.bf16.msra.mxu0 0
        %462 = vmatprep.subr.bf16.mxu0 0
        %463 = vmatpush2.bf16.msra.mxu0 0
        %464 = vmatprep.subr.bf16.mxu0 0
        %465 = vmatpush2.bf16.msra.mxu0 0
        %466 = vmatprep.subr.bf16.mxu0 0
        %467 = vmatpush2.bf16.msra.mxu0 0
        %468 = vmatprep.subr.bf16.mxu0 0
        %469 = vmatpush2.bf16.msra.mxu0 0
        %470 = vmatprep.subr.bf16.mxu0 0
        %471 = vmatpush2.bf16.msra.mxu0 0
        %472 = vmatprep.subr.bf16.mxu0 0
        %473 = vmatpush2.bf16.msra.mxu0 0
        %474 = vmatprep.subr.bf16.mxu0 0
        %475 = vmatpush2.bf16.msra.mxu0 0
        %476 = vmatprep.mubr.bf16.mxu0 0
        %477 = vmatmul.mubr.bf16.gmra.mxu0 %v427
        %v478 = vpop.f32.mrf.mxu0
        %v479 = vadd.f32 0.0, %v478
        %v480 = vpop.f32.mrf.mxu0
        %v481 = vpop.f32.mrf.mxu0
        %v482 = vadd.f32 0.0, %v481
        %v483 = vpop.f32.mrf.mxu0
        %484 = vmatprep.mubr.bf16.mxu0 0
        %485 = vmatmul.mubr.bf16.gmra.mxu0 %v430
        %v486 = vpop.f32.mrf.mxu0
        %v487 = vadd.f32 0.0, %v486
        %v488 = vpop.f32.mrf.mxu0
        %v489 = vpop.f32.mrf.mxu0
        %v490 = vadd.f32 0.0, %v489
        %v491 = vpop.f32.mrf.mxu0
        %492 = vmatprep.mubr.bf16.mxu0 0
        %493 = vmatmul.mubr.bf16.gmra.mxu0 %v433
        %v494 = vpop.f32.mrf.mxu0
        %v495 = vadd.f32 0.0, %v494
        %v496 = vpop.f32.mrf.mxu0
        %v497 = vpop.f32.mrf.mxu0
        %v498 = vadd.f32 0.0, %v497
        %v499 = vpop.f32.mrf.mxu0
        %500 = vmatprep.mubr.bf16.mxu0 0
        %501 = vmatmul.mubr.bf16.gmra.mxu0 %v436
        %v502 = vpop.f32.mrf.mxu0
        %v503 = vadd.f32 0.0, %v502
        %v504 = vpop.f32.mrf.mxu0
        %v505 = vpop.f32.mrf.mxu0
        %v506 = vadd.f32 0.0, %v505
        %v507 = vpop.f32.mrf.mxu0
        %508 = vmatprep.mubr.bf16.mxu0 0
        %509 = vmatmul.mubr.bf16.gmra.mxu0 %v439
        %v510 = vpop.f32.mrf.mxu0
        %v511 = vadd.f32 0.0, %v510
        %v512 = vpop.f32.mrf.mxu0
        %v513 = vpop.f32.mrf.mxu0
        %v514 = vadd.f32 0.0, %v513
        %v515 = vpop.f32.mrf.mxu0
        %516 = vmatprep.mubr.bf16.mxu0 0
        %517 = vmatmul.mubr.bf16.gmra.mxu0 %v442
        %v518 = vpop.f32.mrf.mxu0
        %v519 = vadd.f32 0.0, %v518
        %v520 = vpop.f32.mrf.mxu0
        %v521 = vpop.f32.mrf.mxu0
        %v522 = vadd.f32 0.0, %v521
        %v523 = vpop.f32.mrf.mxu0
        %524 = vdwg.mxu0
        %v525 = vadd.f32 %v339, %v479
        %v526 = vadd.f32 %v340, %v482
        %v527 = vadd.f32 %v341, %v487
        %v528 = vadd.f32 %v342, %v490
        %v529 = vadd.f32 %v343, %v495
        %v530 = vadd.f32 %v344, %v498
        %v531 = vadd.f32 %v345, %v503
        %v532 = vadd.f32 %v346, %v506
        %v533 = vadd.f32 %v347, %v511
        %v534 = vadd.f32 %v348, %v514
        %v535 = vadd.f32 %v349, %v519
        %v536 = vadd.f32 %v350, %v522
        %537 = vst [vmem:[%s298] sm:$0xff] %v525
        %538 = vst [vmem:[%s298 + $0x8] sm:$0xff] %v526
        %539 = vst [vmem:[%s298 + $0x10] sm:$0xff] %v527
        %540 = vst [vmem:[%s298 + $0x18] sm:$0xff] %v528
        %541 = vst [vmem:[%s298 + $0x20] sm:$0xff] %v529
        %542 = vst [vmem:[%s298 + $0x28] sm:$0xff] %v530
        %543 = vst [vmem:[%s298 + $0x30] sm:$0xff] %v531
        %544 = vst [vmem:[%s298 + $0x38] sm:$0xff] %v532
        %545 = vst [vmem:[%s298 + $0x40] sm:$0xff] %v533
        %546 = vst [vmem:[%s298 + $0x48] sm:$0xff] %v534
        %547 = vst [vmem:[%s298 + $0x50] sm:$0xff] %v535
        %548 = vst [vmem:[%s298 + $0x58] sm:$0xff] %v536
        // Predicated region
        $region45: #{tpu_custom_call.1} parent=35 // pred_check
          %p549 = pneg %p323
        $region46: #{tpu_custom_call.1} parent=35 // pred_check_branch
          %551 = sbr.rel (%p549) target = $region48
        $region47: #{tpu_custom_call.1} parent=35 // pred_region
          %v552 = vld [vmem:[%s298] sm:$0xff]
          %v553 = vld [vmem:[%s298 + $0x8] sm:$0xff]
          %v554 = vld [vmem:[%s298 + $0x10] sm:$0xff]
          %v555 = vld [vmem:[%s298 + $0x18] sm:$0xff]
          %v556 = vld [vmem:[%s298 + $0x20] sm:$0xff]
          %v557 = vld [vmem:[%s298 + $0x28] sm:$0xff]
          %v558 = vld [vmem:[%s298 + $0x30] sm:$0xff]
          %v559 = vld [vmem:[%s298 + $0x38] sm:$0xff]
          %v560 = vld [vmem:[%s298 + $0x40] sm:$0xff]
          %v561 = vld [vmem:[%s298 + $0x48] sm:$0xff]
          %v562 = vld [vmem:[%s298 + $0x50] sm:$0xff]
          %v563 = vld [vmem:[%s298 + $0x58] sm:$0xff]
          %v564 = vld [vmem:[%s319] sm:$0x1]
          %v566 = vlaneseq
          %v567 = vshrl.u32 %v566, 7
          %v568 = vsub.s32 0, %v567
          %v569 = vrot.slane %v564, %v568
          %v571 = vadd.f32 %v552, %v569
          %v572 = vadd.f32 %v553, %v569
          %v573 = vadd.f32 %v554, %v569
          %v574 = vadd.f32 %v555, %v569
          %v575 = vadd.f32 %v556, %v569
          %v576 = vadd.f32 %v557, %v569
          %v577 = vadd.f32 %v558, %v569
          %v578 = vadd.f32 %v559, %v569
          %v579 = vadd.f32 %v560, %v569
          %v580 = vadd.f32 %v561, %v569
          %v581 = vadd.f32 %v562, %v569
          %v582 = vadd.f32 %v563, %v569
          %v583 = vld [vmem:[%s255] sm:$0xff]
          %v584 = vld [vmem:[%s255 + $0x8] sm:$0xff]
          %v585 = vld [vmem:[%s255 + $0x10] sm:$0xff]
          %v586 = vld [vmem:[%s255 + $0x18] sm:$0xff]
          %v587 = vld [vmem:[%s255 + $0x20] sm:$0xff]
          %v588 = vld [vmem:[%s255 + $0x28] sm:$0xff]
          %v589 = vld [vmem:[%s255 + $0x30] sm:$0xff]
          %v590 = vld [vmem:[%s255 + $0x38] sm:$0xff]
          %v591 = vld [vmem:[%s255 + $0x40] sm:$0xff]
          %v592 = vld [vmem:[%s255 + $0x48] sm:$0xff]
          %v593 = vld [vmem:[%s255 + $0x50] sm:$0xff]
          %v594 = vld [vmem:[%s255 + $0x58] sm:$0xff]
          %v595 = vadd.f32 %v571, %v583
          %v596 = vadd.f32 %v572, %v584
          %v597 = vadd.f32 %v573, %v585
          %v598 = vadd.f32 %v574, %v586
          %v599 = vadd.f32 %v575, %v587
          %v600 = vadd.f32 %v576, %v588
          %v601 = vadd.f32 %v577, %v589
          %v602 = vadd.f32 %v578, %v590
          %v603 = vadd.f32 %v579, %v591
          %v604 = vadd.f32 %v580, %v592
          %v605 = vadd.f32 %v581, %v593
          %v606 = vadd.f32 %v582, %v594
          %v607 = vmax.f32 %v595, 0.0
          %v608 = vmax.f32 %v596, 0.0
          %v609 = vmax.f32 %v597, 0.0
          %v610 = vmax.f32 %v598, 0.0
          %v611 = vmax.f32 %v599, 0.0
          %v612 = vmax.f32 %v600, 0.0
          %v613 = vmax.f32 %v601, 0.0
          %v614 = vmax.f32 %v602, 0.0
          %v615 = vmax.f32 %v603, 0.0
          %v616 = vmax.f32 %v604, 0.0
          %v617 = vmax.f32 %v605, 0.0
          %v618 = vmax.f32 %v606, 0.0
          %619 = vst [vmem:[%s298] sm:$0xff] %v607
          %620 = vst [vmem:[%s298 + $0x8] sm:$0xff] %v608
          %621 = vst [vmem:[%s298 + $0x10] sm:$0xff] %v609
          %622 = vst [vmem:[%s298 + $0x18] sm:$0xff] %v610
          %623 = vst [vmem:[%s298 + $0x20] sm:$0xff] %v611
          %624 = vst [vmem:[%s298 + $0x28] sm:$0xff] %v612
          %625 = vst [vmem:[%s298 + $0x30] sm:$0xff] %v613
          %626 = vst [vmem:[%s298 + $0x38] sm:$0xff] %v614
          %627 = vst [vmem:[%s298 + $0x40] sm:$0xff] %v615
          %628 = vst [vmem:[%s298 + $0x48] sm:$0xff] %v616
          %629 = vst [vmem:[%s298 + $0x50] sm:$0xff] %v617
          %630 = vst [vmem:[%s298 + $0x58] sm:$0xff] %v618
        $region48: #{tpu_custom_call.1} parent=35 // pred_fallthru
          _
        %s631 = sand.u32 %s160, 1
        %s632 = scalar_lea.sflag [#allocation4], %s631
        %s633 = sand.u32 %s160, 1
        %s634 = smul.addr %s633, 96
        %s635 = scalar_lea.vmem [#allocation5], %s634
        // Predicated region
        $region49: #{tpu_custom_call.1} parent=35 // pred_check
          %p636 = pneg %p170
        $region50: #{tpu_custom_call.1} parent=35 // pred_check_branch
          %638 = sbr.rel (%p636) target = $region52
        $region51: #{tpu_custom_call.1} parent=35 // pred_region
          %s639 = smul.u32 12, %s26
          %s641 = ssub.s32 1536, 1536
          %642 = vsyncadd %s632, %s641
          %s643 = sadd.s32 %s27, %s639
          %s644 = smul.addr %s643, 128
          %s645 = scalar_lea.hbm %s4, %s644
          %s646 = sshll.u32 %s635, 4
          %s647 = int_to_ptr.vmem [resolvable:$true] %s646
          %652 = dma.vmem_to_hbm [thread:$0]  %s647, 1536, %s645, %s632, 128, 128, 8
        $region52: #{tpu_custom_call.1} parent=35 // pred_fallthru
          _
      $region36: #{tpu_custom_call.1} parent=5 // pred_fallthru
        _
      %p653 = scmp.le.s32.totalorder 2, %s16
      // Predicated region
      $region53: #{tpu_custom_call.1} parent=5 // pred_check
        %p654 = pneg %p653
      $region54: #{tpu_custom_call.1} parent=5 // pred_check_branch
        %656 = sbr.rel (%p654) target = $region56
      $region55: #{tpu_custom_call.1} parent=5 // pred_region
        %s657 = ssub.s32 %s16, 2
        // Predicated region
        $region57: #{tpu_custom_call.1} parent=55 // pred_check
          %p658 = pneg %p176
        $region58: #{tpu_custom_call.1} parent=55 // pred_check_branch
          %660 = sbr.rel (%p658) target = $region60
        $region59: #{tpu_custom_call.1} parent=55 // pred_region
          %s661 = sand.u32 %s161, 1
          %s662 = scalar_lea.sflag [#allocation4], %s661
          %s663 = sand.u32 %s161, 1
          %s664 = smul.addr %s663, 96
          %s665 = scalar_lea.vmem [#allocation5], %s664
          %666 = dma.done %s662, 1536
        $region60: #{tpu_custom_call.1} parent=55 // pred_fallthru
          _
      $region56: #{tpu_custom_call.1} parent=5 // pred_fallthru
        _
    $region6: #{tpu_custom_call.1} parent=1 // loop_footer
      %s20 = sadd.s32 1, %s16
    $region7: #{tpu_custom_call.1} parent=1 // loop_footer_branch
      %15 = sbr.rel target = $region3
    $region8: #{tpu_custom_call.1} parent=1 // loop_exit
      _
    %667 = vsyncpa [#allocation3], 1
    %s668 = scalar_lea.sflag [#allocation3], 1
    %669 = vsyncpa %s668, 1
    %670 = vsyncpa [#allocation4], 1
    %s671 = scalar_lea.sflag [#allocation4], 1
    %672 = vsyncpa %s671, 1

</llo_original>
